<compile_context>
chip_gen: v6e
topology: v6e:2x2x1
jax: 0.10.0
libtpu: 0.0.40
codegen_flags: <defaults>
</compile_context>

<pallas_src>
import functools

import jax
import jax.numpy as jnp
from jax.experimental import pallas as pl
from jax.experimental.pallas import tpu as pltpu

HIDDEN = 128
ATOM_PAD = 128          # each action's atom block padded to one full 128-lane vreg
NEG_BIG = -1e30         # bias for padded atom lanes -> exp() == 0


def categorical_dqn_kernel(out_dim,
                           x_ref,
                           wf_ref, bf_ref,
                           wh_ref, bh_ref,
                           wo_ref, bo_ref,
                           s_ref,
                           q_ref):
    """One batch-tile of the full forward pass."""
    x = x_ref[...]                                                   # (Bt, in_dim)

    # feature_layer: Linear(in_dim, 128) + ReLU
    feature = jnp.maximum(
        jnp.dot(x, wf_ref[...], preferred_element_type=jnp.float32) + bf_ref[...],
        0.0)                                                         # (Bt, 128)

    # fused hidden layer: [value1 | advantage1] in one (128, 256) matmul + ReLU
    hid = jnp.maximum(
        jnp.dot(feature, wh_ref[...], preferred_element_type=jnp.float32) + bh_ref[...],
        0.0)                                                         # (Bt, 256)

    # fused dueling output: Wo already folds value2 + (advantage2 - mean over
    # actions), so this single matmul emits q_atoms for every action, each
    # action in its own 128-lane-aligned block (padded lanes biased to -1e30).
    q_atoms = (jnp.dot(hid, wo_ref[...], preferred_element_type=jnp.float32)
               + bo_ref[...])                                        # (Bt, out_dim*128)

    # per-action softmax over atoms; aligned 128-lane blocks are free views.
    dist_blocks = []
    for a in range(out_dim):
        blk = q_atoms[:, a * ATOM_PAD:(a + 1) * ATOM_PAD]            # (Bt, 128)
        blk = blk - jnp.max(blk, axis=-1, keepdims=True)
        e = jnp.exp(blk)                                             # padded lanes -> 0
        dist = e / jnp.sum(e, axis=-1, keepdims=True)                # exact division
        dist_blocks.append(jnp.maximum(dist, 0.001))                 # torch .clamp(min=0.001)
    dist_all = jnp.concatenate(dist_blocks, axis=1)                  # (Bt, out_dim*128)

    # expectation: one MXU dot with the block-structured support matrix.
    # Padded-lane dists (clamped to 0.001) hit all-zero support rows -> 0.
    q_ref[...] = jnp.dot(dist_all, s_ref[...],
                         preferred_element_type=jnp.float32)         # (Bt, 128)


def pack_params(params, out_dim, atom_dim):
    """Wrapper-side weight packing (done once, outside the kernel)."""
    # hidden layer: [value1 | advantage1]
    wh = jnp.concatenate([params["wv1"], params["wa1"]], axis=1)     # (128, 256)
    bh = jnp.concatenate([params["bv1"], params["ba1"]], axis=1)     # (1, 256)

    # fold the dueling combine into the output weights:
    #   q_atoms_a = val_hid @ wv2 + bv2 + adv_hid @ (wa2_a - mean_a' wa2_a')
    #                                   + (ba2_a - mean_a' ba2_a')
    wa2 = params["wa2"].reshape(HIDDEN, out_dim, atom_dim)
    ba2 = params["ba2"].reshape(1, out_dim, atom_dim)
    wa2_c = wa2 - wa2.mean(axis=1, keepdims=True)
    ba2_c = ba2 - ba2.mean(axis=1, keepdims=True)

    wo = jnp.zeros((2 * HIDDEN, out_dim * ATOM_PAD), jnp.float32)
    bo = jnp.full((1, out_dim * ATOM_PAD), NEG_BIG, jnp.float32)
    for a in range(out_dim):
        lo = a * ATOM_PAD
        wo = wo.at[:HIDDEN, lo:lo + atom_dim].set(params["wv2"])
        wo = wo.at[HIDDEN:, lo:lo + atom_dim].set(wa2_c[:, a, :])
        bo = bo.at[:, lo:lo + atom_dim].set(params["bv2"] + ba2_c[:, a, :])
    return wh, bh, wo, bo


def make_support_matrix(support, out_dim, atom_dim):
    """S[a*128 + t, a] = support[t] for t < atom_dim, else 0."""
    sup = jnp.asarray(support, jnp.float32).reshape(atom_dim)
    s = jnp.zeros((out_dim * ATOM_PAD, ATOM_PAD), jnp.float32)
    for a in range(out_dim):
        s = s.at[a * ATOM_PAD:a * ATOM_PAD + atom_dim, a].set(sup)
    return s


def network_forward(x, params, support, out_dim, atom_dim, *, b_tile_max=512):
    B, in_dim = x.shape
    wh, bh, wo, bo = pack_params(params, out_dim, atom_dim)
    s_mat = make_support_matrix(support, out_dim, atom_dim)

    def round_up(v, m):
        return ((v + m - 1) // m) * m

    # tile selection: big tiles to amortize per-grid-step overhead, but keep
    # >=2 grid steps for larger batches so the "parallel" batch axis can
    # shard across v7x's two TensorCores.
    if B <= 8:
        b_tile = 8
    else:
        b_tile = min(b_tile_max, round_up((B + 1) // 2, 8))
    b_pad = round_up(B, b_tile)
    if b_pad != B:
        x = jnp.zeros((b_pad, in_dim), x.dtype).at[:B].set(x)

    def full_spec(arr):
        nd = arr.ndim
        return pl.BlockSpec(arr.shape, lambda i, _nd=nd: (0,) * _nd)

    kern = functools.partial(categorical_dqn_kernel, out_dim)
    args = (x, params["wf"], params["bf"], wh, bh, wo, bo, s_mat)

    q_pad = pl.pallas_call(
        kern,
        out_shape=jax.ShapeDtypeStruct((b_pad, ATOM_PAD), jnp.float32),
        grid=(b_pad // b_tile,),
        in_specs=[
            pl.BlockSpec((b_tile, in_dim), lambda i: (i, 0)),   # x: tiled over batch
            full_spec(params["wf"]), full_spec(params["bf"]),   # weights: resident
            full_spec(wh), full_spec(bh),
            full_spec(wo), full_spec(bo),
            full_spec(s_mat),
        ],
        out_specs=pl.BlockSpec((b_tile, ATOM_PAD), lambda i: (i, 0)),
        compiler_params=pltpu.CompilerParams(
            dimension_semantics=("parallel",)),
    )(*args)
    return q_pad[:B, :out_dim]


def init_linear(key, fan_in, fan_out):
    """PyTorch-style uniform(-1/sqrt(fan_in), 1/sqrt(fan_in)); weight stored (in, out)."""
    kw, kb = jax.random.split(key)
    bound = 1.0 / float(fan_in) ** 0.5
    w = jax.random.uniform(kw, (fan_in, fan_out), jnp.float32, -bound, bound)
    b = jax.random.uniform(kb, (1, fan_out), jnp.float32, -bound, bound)
    return w, b


def init_params(key, in_dim, out_dim, atom_dim):
    keys = jax.random.split(key, 5)
    wf, bf = init_linear(keys[0], in_dim, HIDDEN)
    wa1, ba1 = init_linear(keys[1], HIDDEN, HIDDEN)
    wa2, ba2 = init_linear(keys[2], HIDDEN, out_dim * atom_dim)
    wv1, bv1 = init_linear(keys[3], HIDDEN, HIDDEN)
    wv2, bv2 = init_linear(keys[4], HIDDEN, atom_dim)
    return dict(wf=wf, bf=bf, wa1=wa1, ba1=ba1, wa2=wa2, ba2=ba2,
                wv1=wv1, bv1=bv1, wv2=wv2, bv2=bv2)


def reference_forward(x, params, support, out_dim, atom_dim):
    """Pure-JAX reference mirroring the PyTorch module."""
    feature = jax.nn.relu(x @ params["wf"] + params["bf"])
    val_hid = jax.nn.relu(feature @ params["wv1"] + params["bv1"])
    value = (val_hid @ params["wv2"] + params["bv2"]).reshape(-1, 1, atom_dim)
    adv_hid = jax.nn.relu(feature @ params["wa1"] + params["ba1"])
    advantage = (adv_hid @ params["wa2"] + params["ba2"]).reshape(-1, out_dim, atom_dim)
    q_atoms = value + advantage - advantage.mean(axis=1, keepdims=True)
    dist = jax.nn.softmax(q_atoms, axis=-1)
    dist = jnp.maximum(dist, 0.001)          # torch .clamp(min=0.001)
    return jnp.sum(dist * jnp.asarray(support).reshape(1, 1, atom_dim), axis=2)


if __name__ == "__main__":
    # Small, module-consistent shapes: state vector input (B, in_dim).
    B, in_dim, out_dim, atom_dim = 2, 16, 4, 51

    key = jax.random.PRNGKey(0)
    k_params, k_x = jax.random.split(key)
    params = init_params(k_params, in_dim, out_dim, atom_dim)

    x = jax.random.normal(k_x, (B, in_dim), jnp.float32)
    # C51 support (v_min=0, v_max=200).
    support = jnp.linspace(0.0, 200.0, atom_dim, dtype=jnp.float32)

    q = network_forward(x, params, support, out_dim, atom_dim)
    q = jax.block_until_ready(q)

    q_ref = reference_forward(x, params, support, out_dim, atom_dim)
    assert q.shape == (B, out_dim)
    # exact-division softmax restores tight f32 agreement with the reference
    assert jnp.allclose(q, q_ref, rtol=1e-3, atol=1e-2), (q, q_ref)

    print("KERNEL_OK")
</pallas_src>

<mosaic_0001>
module attributes {stable_mosaic.version = 11 : i64} {
  func.func @categorical_dqn_kernel(%arg0: i32, %arg1: memref<8x16xf32, #tpu.memory_space<vmem>>, %arg2: memref<16x128xf32, #tpu.memory_space<vmem>>, %arg3: memref<1x128xf32, #tpu.memory_space<vmem>>, %arg4: memref<128x256xf32, #tpu.memory_space<vmem>>, %arg5: memref<1x256xf32, #tpu.memory_space<vmem>>, %arg6: memref<256x512xf32, #tpu.memory_space<vmem>>, %arg7: memref<1x512xf32, #tpu.memory_space<vmem>>, %arg8: memref<512x128xf32, #tpu.memory_space<vmem>>, %arg9: memref<8x128xf32, #tpu.memory_space<vmem>>) attributes {dimension_semantics = [#tpu.dimension_semantics<parallel>], iteration_bounds = array<i64: 1>, scalar_prefetch = 0 : i64, scratch_operands = 0 : i64, tpu.core_type = #tpu.core_type<tc>, window_params = [{transform_indices = @transform_0, window_bounds = array<i64: 8, 16>}, {pipeline_mode = #tpu.pipeline_mode<synchronous>, transform_indices = @transform_1, window_bounds = array<i64: 16, 128>}, {pipeline_mode = #tpu.pipeline_mode<synchronous>, transform_indices = @transform_2, window_bounds = array<i64: 1, 128>}, {pipeline_mode = #tpu.pipeline_mode<synchronous>, transform_indices = @transform_3, window_bounds = array<i64: 128, 256>}, {pipeline_mode = #tpu.pipeline_mode<synchronous>, transform_indices = @transform_4, window_bounds = array<i64: 1, 256>}, {pipeline_mode = #tpu.pipeline_mode<synchronous>, transform_indices = @transform_5, window_bounds = array<i64: 256, 512>}, {pipeline_mode = #tpu.pipeline_mode<synchronous>, transform_indices = @transform_6, window_bounds = array<i64: 1, 512>}, {pipeline_mode = #tpu.pipeline_mode<synchronous>, transform_indices = @transform_7, window_bounds = array<i64: 512, 128>}, {transform_indices = @transform_8, window_bounds = array<i64: 8, 128>}]} {
    %c0 = arith.constant 0 : index
    %c0_0 = arith.constant 0 : index
    %0 = vector.load %arg1[%c0, %c0_0] : memref<8x16xf32, #tpu.memory_space<vmem>>, vector<8x16xf32>
    %c0_1 = arith.constant 0 : index
    %c0_2 = arith.constant 0 : index
    %1 = vector.load %arg2[%c0_1, %c0_2] : memref<16x128xf32, #tpu.memory_space<vmem>>, vector<16x128xf32>
    %cst = arith.constant dense<0.000000e+00> : vector<8x128xf32>
    %2 = tpu.matmul %0, %1, %cst {dimension_numbers = #tpu.dot_dimension_numbers<[1], [0], [0], [1], [0, 0, 1, 1], [], []>} : vector<8x16xf32>, vector<16x128xf32>, vector<8x128xf32> -> vector<8x128xf32>
    %c0_3 = arith.constant 0 : index
    %c0_4 = arith.constant 0 : index
    %3 = vector.load %arg3[%c0_3, %c0_4] : memref<1x128xf32, #tpu.memory_space<vmem>>, vector<1x128xf32>
    %4 = vector.broadcast %3 : vector<1x128xf32> to vector<8x128xf32>
    %5 = arith.addf %2, %4 : vector<8x128xf32>
    %cst_5 = arith.constant 0.000000e+00 : f32
    %6 = vector.broadcast %cst_5 : f32 to vector<8x128xf32>
    %7 = arith.maximumf %5, %6 : vector<8x128xf32>
    %c0_6 = arith.constant 0 : index
    %c0_7 = arith.constant 0 : index
    %8 = vector.load %arg4[%c0_6, %c0_7] : memref<128x256xf32, #tpu.memory_space<vmem>>, vector<128x256xf32>
    %cst_8 = arith.constant dense<0.000000e+00> : vector<8x256xf32>
    %9 = tpu.matmul %7, %8, %cst_8 {dimension_numbers = #tpu.dot_dimension_numbers<[1], [0], [0], [1], [0, 0, 1, 1], [], []>} : vector<8x128xf32>, vector<128x256xf32>, vector<8x256xf32> -> vector<8x256xf32>
    %c0_9 = arith.constant 0 : index
    %c0_10 = arith.constant 0 : index
    %10 = vector.load %arg5[%c0_9, %c0_10] : memref<1x256xf32, #tpu.memory_space<vmem>>, vector<1x256xf32>
    %11 = vector.broadcast %10 : vector<1x256xf32> to vector<8x256xf32>
    %12 = arith.addf %9, %11 : vector<8x256xf32>
    %cst_11 = arith.constant 0.000000e+00 : f32
    %13 = vector.broadcast %cst_11 : f32 to vector<8x256xf32>
    %14 = arith.maximumf %12, %13 : vector<8x256xf32>
    %c0_12 = arith.constant 0 : index
    %c0_13 = arith.constant 0 : index
    %15 = vector.load %arg6[%c0_12, %c0_13] : memref<256x512xf32, #tpu.memory_space<vmem>>, vector<256x512xf32>
    %cst_14 = arith.constant dense<0.000000e+00> : vector<8x512xf32>
    %16 = tpu.matmul %14, %15, %cst_14 {dimension_numbers = #tpu.dot_dimension_numbers<[1], [0], [0], [1], [0, 0, 1, 1], [], []>} : vector<8x256xf32>, vector<256x512xf32>, vector<8x512xf32> -> vector<8x512xf32>
    %c0_15 = arith.constant 0 : index
    %c0_16 = arith.constant 0 : index
    %17 = vector.load %arg7[%c0_15, %c0_16] : memref<1x512xf32, #tpu.memory_space<vmem>>, vector<1x512xf32>
    %18 = vector.broadcast %17 : vector<1x512xf32> to vector<8x512xf32>
    %19 = arith.addf %16, %18 : vector<8x512xf32>
    %20 = vector.extract_strided_slice %19 {offsets = [0, 0], sizes = [8, 128], strides = [1, 1]} : vector<8x512xf32> to vector<8x128xf32>
    %cst_17 = arith.constant dense<0xFF800000> : vector<8xf32>
    %21 = vector.multi_reduction <maximumf>, %20, %cst_17 [1] : vector<8x128xf32> to vector<8xf32>
    %22 = vector.shape_cast %21 : vector<8xf32> to vector<8x1xf32>
    %23 = vector.broadcast %22 : vector<8x1xf32> to vector<8x128xf32>
    %24 = arith.subf %20, %23 : vector<8x128xf32>
    %25 = math.exp %24 : vector<8x128xf32>
    %cst_18 = arith.constant dense<0.000000e+00> : vector<8xf32>
    %26 = vector.multi_reduction <add>, %25, %cst_18 [1] : vector<8x128xf32> to vector<8xf32>
    %27 = vector.shape_cast %26 : vector<8xf32> to vector<8x1xf32>
    %28 = vector.broadcast %27 : vector<8x1xf32> to vector<8x128xf32>
    %29 = arith.divf %25, %28 : vector<8x128xf32>
    %cst_19 = arith.constant 1.000000e-03 : f32
    %30 = vector.broadcast %cst_19 : f32 to vector<8x128xf32>
    %31 = arith.maximumf %29, %30 : vector<8x128xf32>
    %32 = vector.extract_strided_slice %19 {offsets = [0, 128], sizes = [8, 128], strides = [1, 1]} : vector<8x512xf32> to vector<8x128xf32>
    %cst_20 = arith.constant dense<0xFF800000> : vector<8xf32>
    %33 = vector.multi_reduction <maximumf>, %32, %cst_20 [1] : vector<8x128xf32> to vector<8xf32>
    %34 = vector.shape_cast %33 : vector<8xf32> to vector<8x1xf32>
    %35 = vector.broadcast %34 : vector<8x1xf32> to vector<8x128xf32>
    %36 = arith.subf %32, %35 : vector<8x128xf32>
    %37 = math.exp %36 : vector<8x128xf32>
    %cst_21 = arith.constant dense<0.000000e+00> : vector<8xf32>
    %38 = vector.multi_reduction <add>, %37, %cst_21 [1] : vector<8x128xf32> to vector<8xf32>
    %39 = vector.shape_cast %38 : vector<8xf32> to vector<8x1xf32>
    %40 = vector.broadcast %39 : vector<8x1xf32> to vector<8x128xf32>
    %41 = arith.divf %37, %40 : vector<8x128xf32>
    %cst_22 = arith.constant 1.000000e-03 : f32
    %42 = vector.broadcast %cst_22 : f32 to vector<8x128xf32>
    %43 = arith.maximumf %41, %42 : vector<8x128xf32>
    %44 = vector.extract_strided_slice %19 {offsets = [0, 256], sizes = [8, 128], strides = [1, 1]} : vector<8x512xf32> to vector<8x128xf32>
    %cst_23 = arith.constant dense<0xFF800000> : vector<8xf32>
    %45 = vector.multi_reduction <maximumf>, %44, %cst_23 [1] : vector<8x128xf32> to vector<8xf32>
    %46 = vector.shape_cast %45 : vector<8xf32> to vector<8x1xf32>
    %47 = vector.broadcast %46 : vector<8x1xf32> to vector<8x128xf32>
    %48 = arith.subf %44, %47 : vector<8x128xf32>
    %49 = math.exp %48 : vector<8x128xf32>
    %cst_24 = arith.constant dense<0.000000e+00> : vector<8xf32>
    %50 = vector.multi_reduction <add>, %49, %cst_24 [1] : vector<8x128xf32> to vector<8xf32>
    %51 = vector.shape_cast %50 : vector<8xf32> to vector<8x1xf32>
    %52 = vector.broadcast %51 : vector<8x1xf32> to vector<8x128xf32>
    %53 = arith.divf %49, %52 : vector<8x128xf32>
    %cst_25 = arith.constant 1.000000e-03 : f32
    %54 = vector.broadcast %cst_25 : f32 to vector<8x128xf32>
    %55 = arith.maximumf %53, %54 : vector<8x128xf32>
    %56 = vector.extract_strided_slice %19 {offsets = [0, 384], sizes = [8, 128], strides = [1, 1]} : vector<8x512xf32> to vector<8x128xf32>
    %cst_26 = arith.constant dense<0xFF800000> : vector<8xf32>
    %57 = vector.multi_reduction <maximumf>, %56, %cst_26 [1] : vector<8x128xf32> to vector<8xf32>
    %58 = vector.shape_cast %57 : vector<8xf32> to vector<8x1xf32>
    %59 = vector.broadcast %58 : vector<8x1xf32> to vector<8x128xf32>
    %60 = arith.subf %56, %59 : vector<8x128xf32>
    %61 = math.exp %60 : vector<8x128xf32>
    %cst_27 = arith.constant dense<0.000000e+00> : vector<8xf32>
    %62 = vector.multi_reduction <add>, %61, %cst_27 [1] : vector<8x128xf32> to vector<8xf32>
    %63 = vector.shape_cast %62 : vector<8xf32> to vector<8x1xf32>
    %64 = vector.broadcast %63 : vector<8x1xf32> to vector<8x128xf32>
    %65 = arith.divf %61, %64 : vector<8x128xf32>
    %cst_28 = arith.constant 1.000000e-03 : f32
    %66 = vector.broadcast %cst_28 : f32 to vector<8x128xf32>
    %67 = arith.maximumf %65, %66 : vector<8x128xf32>
    %68 = tpu.concatenate %31, %43, %55, %67 in 1 : vector<8x128xf32>, vector<8x128xf32>, vector<8x128xf32>, vector<8x128xf32> -> vector<8x512xf32>
    %c0_29 = arith.constant 0 : index
    %c0_30 = arith.constant 0 : index
    %69 = vector.load %arg8[%c0_29, %c0_30] : memref<512x128xf32, #tpu.memory_space<vmem>>, vector<512x128xf32>
    %cst_31 = arith.constant dense<0.000000e+00> : vector<8x128xf32>
    %70 = tpu.matmul %68, %69, %cst_31 {dimension_numbers = #tpu.dot_dimension_numbers<[1], [0], [0], [1], [0, 0, 1, 1], [], []>} : vector<8x512xf32>, vector<512x128xf32>, vector<8x128xf32> -> vector<8x128xf32>
    %c0_32 = arith.constant 0 : index
    %c0_33 = arith.constant 0 : index
    %71 = vector.load %arg9[%c0_32, %c0_33] : memref<8x128xf32, #tpu.memory_space<vmem>>, vector<8x128xf32>
    tpu.vector_store %arg9[%c0_32, %c0_33], %70 {strides = array<i32>} : memref<8x128xf32, #tpu.memory_space<vmem>>, vector<8x128xf32>,
    return
  }
  func.func @transform_0(%arg0: i32) -> (i32, i32) {
    %c0_i32 = arith.constant 0 : i32
    %c0_i32_0 = arith.constant 0 : i32
    return %arg0, %c0_i32 : i32, i32
  }
  func.func @transform_1(%arg0: i32) -> (i32, i32) {
    %c0_i32 = arith.constant 0 : i32
    %c0_i32_0 = arith.constant 0 : i32
    %c0_i32_1 = arith.constant 0 : i32
    return %c0_i32, %c0_i32_0 : i32, i32
  }
  func.func @transform_2(%arg0: i32) -> (i32, i32) {
    %c0_i32 = arith.constant 0 : i32
    %c0_i32_0 = arith.constant 0 : i32
    %c0_i32_1 = arith.constant 0 : i32
    return %c0_i32, %c0_i32_0 : i32, i32
  }
  func.func @transform_3(%arg0: i32) -> (i32, i32) {
    %c0_i32 = arith.constant 0 : i32
    %c0_i32_0 = arith.constant 0 : i32
    %c0_i32_1 = arith.constant 0 : i32
    return %c0_i32, %c0_i32_0 : i32, i32
  }
  func.func @transform_4(%arg0: i32) -> (i32, i32) {
    %c0_i32 = arith.constant 0 : i32
    %c0_i32_0 = arith.constant 0 : i32
    %c0_i32_1 = arith.constant 0 : i32
    return %c0_i32, %c0_i32_0 : i32, i32
  }
  func.func @transform_5(%arg0: i32) -> (i32, i32) {
    %c0_i32 = arith.constant 0 : i32
    %c0_i32_0 = arith.constant 0 : i32
    %c0_i32_1 = arith.constant 0 : i32
    return %c0_i32, %c0_i32_0 : i32, i32
  }
  func.func @transform_6(%arg0: i32) -> (i32, i32) {
    %c0_i32 = arith.constant 0 : i32
    %c0_i32_0 = arith.constant 0 : i32
    %c0_i32_1 = arith.constant 0 : i32
    return %c0_i32, %c0_i32_0 : i32, i32
  }
  func.func @transform_7(%arg0: i32) -> (i32, i32) {
    %c0_i32 = arith.constant 0 : i32
    %c0_i32_0 = arith.constant 0 : i32
    %c0_i32_1 = arith.constant 0 : i32
    return %c0_i32, %c0_i32_0 : i32, i32
  }
  func.func @transform_8(%arg0: i32) -> (i32, i32) {
    %c0_i32 = arith.constant 0 : i32
    %c0_i32_0 = arith.constant 0 : i32
    return %arg0, %c0_i32 : i32, i32
  }
}

</mosaic_0001>

<llo_original>
// kernel: tpu_custom_call.1
$region0: #{tpu_custom_call.1}
  #allocation0 [shape = 'u32[]', space=smem, size = 0x4, offset = 0x4, fixed_abs, tag = 'smem constant byte address 0x4 - core index']
  #allocation1 [shape = 'u32[144,128]{1,0:T(1,128)}', space=vmem, size = 0x12000, scoped, tag = 'internal scratch']
  %s0 = inlined_call_operand.hbm [shape: f32[8,16], index: 0, kind: input, shape index: {}]
  %s1 = inlined_call_operand.hbm [shape: f32[16,128], index: 1, kind: input, shape index: {}]
  %s2 = inlined_call_operand.vmem [shape: f32[1,128], index: 2, kind: input, shape index: {}]
  %s3 = inlined_call_operand.hbm [shape: f32[128,256], index: 3, kind: input, shape index: {}]
  %s4 = inlined_call_operand.vmem [shape: f32[1,256], index: 4, kind: input, shape index: {}]
  %s5 = inlined_call_operand.hbm [shape: f32[256,512], index: 5, kind: input, shape index: {}]
  %s6 = inlined_call_operand.vmem [shape: f32[1,512], index: 6, kind: input, shape index: {}]
  %s7 = inlined_call_operand.hbm [shape: f32[512,128], index: 7, kind: input, shape index: {}]
  %s8 = inlined_call_operand.hbm [shape: f32[8,128], index: 8, kind: output, shape index: {}]
  %s9 = sld [smem:[#allocation0]]
  $region62: #{tpu_custom_call.1} parent=0
    _
  %s11 = ssub.s32 1, %s9
  %s12 = scalar_select 0, %s11, %s9
  $region1: #{tpu_custom_call.1} parent=0
    #allocation2 [shape = 'u8[4096]{0}', space=vmem, size = 0x1000, scoped, tag = 'input window, operand 0, single buffered']
    #allocation3 [shape = 's32[1]{0}', space=sflag, size = 0x4, scoped, tag = 'scoped memory for tpu_custom_call.1']
    #allocation4 [shape = 's32[1]{0}', space=sflag, size = 0x4, scoped, tag = 'scoped memory for tpu_custom_call.1']
    #allocation5 [shape = 'u8[8192]{0}', space=vmem, size = 0x2000, scoped, tag = 'input window, operand 1, single buffered']
    #allocation6 [shape = 's32[1]{0}', space=sflag, size = 0x4, scoped, tag = 'scoped memory for tpu_custom_call.1']
    #allocation7 [shape = 'u8[131072]{0}', space=vmem, size = 0x20000, scoped, tag = 'input window, operand 3, single buffered']
    #allocation8 [shape = 'u8[524288]{0}', space=vmem, size = 0x80000, scoped, tag = 'input window, operand 5, single buffered']
    #allocation9 [shape = 's32[1]{0}', space=sflag, size = 0x4, scoped, tag = 'scoped memory for tpu_custom_call.1']
    #allocation10 [shape = 'u8[262144]{0}', space=vmem, size = 0x40000, scoped, tag = 'input window, operand 7, single buffered']
    #allocation11 [shape = 'u8[4096]{0}', space=vmem, size = 0x1000, scoped, tag = 'output window, operand 0, single buffered']
    %13 = vsyncpa [#allocation3], 0
    %14 = vsyncpa [#allocation6], 0
    %15 = vsyncpa [#allocation9], 0
    %16 = vsyncpa [#allocation4], 0
    // Predicated region
    $region2: #{tpu_custom_call.1} parent=1 // pred_check
      _
    $region3: #{tpu_custom_call.1} parent=1 // pred_check_branch
      %18 = sbr.rel (0) target = $region5
    $region4: #{tpu_custom_call.1} parent=1 // pred_region
      %s20 = ssub.s32 128, 128
      %21 = vsyncadd [#allocation3], %s20
      %s23 = sshll.u32 [#allocation2], 4
      %s24 = int_to_ptr.vmem [resolvable:$true] %s23
      %26 = dma.hbm_to_vmem [thread:$0]  %s0, 128, %s24, [#allocation3]
    $region5: #{tpu_custom_call.1} parent=1 // pred_fallthru
      _
    // Predicated region
    $region6: #{tpu_custom_call.1} parent=1 // pred_check
      _
    $region7: #{tpu_custom_call.1} parent=1 // pred_check_branch
      %28 = sbr.rel (0) target = $region9
    $region8: #{tpu_custom_call.1} parent=1 // pred_region
      %s30 = ssub.s32 256, 256
      %31 = vsyncadd [#allocation6], %s30
      %s32 = sshll.u32 [#allocation5], 4
      %s33 = int_to_ptr.vmem [resolvable:$true] %s32
      %38 = dma.hbm_to_vmem [thread:$0]  %s1, 256, %s33, [#allocation6], 128, 128, 8
    $region9: #{tpu_custom_call.1} parent=1 // pred_fallthru
      _
    // Predicated region
    $region10: #{tpu_custom_call.1} parent=1 // pred_check
      _
    $region11: #{tpu_custom_call.1} parent=1 // pred_check_branch
      %40 = sbr.rel (0) target = $region13
    $region12: #{tpu_custom_call.1} parent=1 // pred_region
      _
    $region13: #{tpu_custom_call.1} parent=1 // pred_fallthru
      _
    // Predicated region
    $region14: #{tpu_custom_call.1} parent=1 // pred_check
      _
    $region15: #{tpu_custom_call.1} parent=1 // pred_check_branch
      %42 = sbr.rel (0) target = $region17
    $region16: #{tpu_custom_call.1} parent=1 // pred_region
      %s44 = ssub.s32 4096, 4096
      %45 = vsyncadd [#allocation6], %s44
      %s46 = sshll.u32 [#allocation7], 4
      %s47 = int_to_ptr.vmem [resolvable:$true] %s46
      %52 = dma.hbm_to_vmem [thread:$0]  %s3, 4096, %s47, [#allocation6], 256, 256, 16
    $region17: #{tpu_custom_call.1} parent=1 // pred_fallthru
      _
    // Predicated region
    $region18: #{tpu_custom_call.1} parent=1 // pred_check
      _
    $region19: #{tpu_custom_call.1} parent=1 // pred_check_branch
      %54 = sbr.rel (0) target = $region21
    $region20: #{tpu_custom_call.1} parent=1 // pred_region
      _
    $region21: #{tpu_custom_call.1} parent=1 // pred_fallthru
      _
    // Predicated region
    $region22: #{tpu_custom_call.1} parent=1 // pred_check
      _
    $region23: #{tpu_custom_call.1} parent=1 // pred_check_branch
      %56 = sbr.rel (0) target = $region25
    $region24: #{tpu_custom_call.1} parent=1 // pred_region
      %s58 = ssub.s32 16384, 16384
      %59 = vsyncadd [#allocation9], %s58
      %s60 = sshll.u32 [#allocation8], 4
      %s61 = int_to_ptr.vmem [resolvable:$true] %s60
      %66 = dma.hbm_to_vmem [thread:$0]  %s5, 16384, %s61, [#allocation9], 512, 512, 32
    $region25: #{tpu_custom_call.1} parent=1 // pred_fallthru
      _
    // Predicated region
    $region26: #{tpu_custom_call.1} parent=1 // pred_check
      _
    $region27: #{tpu_custom_call.1} parent=1 // pred_check_branch
      %68 = sbr.rel (0) target = $region29
    $region28: #{tpu_custom_call.1} parent=1 // pred_region
      _
    $region29: #{tpu_custom_call.1} parent=1 // pred_fallthru
      _
    // Predicated region
    $region30: #{tpu_custom_call.1} parent=1 // pred_check
      _
    $region31: #{tpu_custom_call.1} parent=1 // pred_check_branch
      %70 = sbr.rel (0) target = $region33
    $region32: #{tpu_custom_call.1} parent=1 // pred_region
      %s72 = ssub.s32 8192, 8192
      %73 = vsyncadd [#allocation9], %s72
      %s74 = sshll.u32 [#allocation10], 4
      %s75 = int_to_ptr.vmem [resolvable:$true] %s74
      %80 = dma.hbm_to_vmem [thread:$0]  %s7, 8192, %s75, [#allocation9], 128, 128, 8
    $region33: #{tpu_custom_call.1} parent=1 // pred_fallthru
      _
    // Predicated region
    $region34: #{tpu_custom_call.1} parent=1 // pred_check
      _
    $region35: #{tpu_custom_call.1} parent=1 // pred_check_branch
      %82 = sbr.rel (0) target = $region37
    $region36: #{tpu_custom_call.1} parent=1 // pred_region
      %83 = dma.done [#allocation3], 128
    $region37: #{tpu_custom_call.1} parent=1 // pred_fallthru
      _
    // Predicated region
    $region38: #{tpu_custom_call.1} parent=1 // pred_check
      _
    $region39: #{tpu_custom_call.1} parent=1 // pred_check_branch
      %85 = sbr.rel (0) target = $region41
    $region40: #{tpu_custom_call.1} parent=1 // pred_region
      %86 = dma.done [#allocation6], 256
    $region41: #{tpu_custom_call.1} parent=1 // pred_fallthru
      _
    // Predicated region
    $region42: #{tpu_custom_call.1} parent=1 // pred_check
      _
    $region43: #{tpu_custom_call.1} parent=1 // pred_check_branch
      %88 = sbr.rel (0) target = $region45
    $region44: #{tpu_custom_call.1} parent=1 // pred_region
      %89 = dma.done [#allocation6], 4096
    $region45: #{tpu_custom_call.1} parent=1 // pred_fallthru
      _
    // Predicated region
    $region46: #{tpu_custom_call.1} parent=1 // pred_check
      _
    $region47: #{tpu_custom_call.1} parent=1 // pred_check_branch
      %91 = sbr.rel (0) target = $region49
    $region48: #{tpu_custom_call.1} parent=1 // pred_region
      %92 = dma.done [#allocation9], 16384
    $region49: #{tpu_custom_call.1} parent=1 // pred_fallthru
      _
    // Predicated region
    $region50: #{tpu_custom_call.1} parent=1 // pred_check
      _
    $region51: #{tpu_custom_call.1} parent=1 // pred_check_branch
      %94 = sbr.rel (0) target = $region53
    $region52: #{tpu_custom_call.1} parent=1 // pred_region
      %95 = dma.done [#allocation9], 8192
    $region53: #{tpu_custom_call.1} parent=1 // pred_fallthru
      _
    %v96 = vld [vmem:[#allocation2] sm:$0xff]
    %v97 = vld [vmem:[#allocation5] sm:$0xff]
    %v98 = vld [vmem:[#allocation5 + $0x8] sm:$0xff]
    %v99 = vld [vmem:[%s2] sm:$0x1]
    %v101 = vlaneseq
    %v102 = vshrl.u32 %v101, 7
    %v103 = vsub.s32 0, %v102
    %v104 = vrot.slane %v99, %v103
    %vm106 = vcmask 130048
    %v108 = vsel %vm106, %v96, 0
    %110 = vmatprep.subr.mxu0 0.0
    %111 = vmatpush1.msra.mxu0 0.0
    %112 = vmatprep.subr.mxu0 0.0
    %113 = vmatpush1.msra.mxu0 0.0
    %114 = vmatprep.subr.mxu0 0.0
    %115 = vmatpush1.msra.mxu0 0.0
    %116 = vmatprep.subr.mxu0 0.0
    %117 = vmatpush1.msra.mxu0 0.0
    %118 = vmatprep.subr.mxu0 0.0
    %119 = vmatpush1.msra.mxu0 0.0
    %120 = vmatprep.subr.mxu0 0.0
    %121 = vmatpush1.msra.mxu0 0.0
    %122 = vmatprep.subr.mxu0 0.0
    %123 = vmatpush1.msra.mxu0 0.0
    %124 = vmatprep.subr.mxu0 0.0
    %125 = vmatpush1.msra.mxu0 0.0
    %126 = vmatprep.subr.mxu0 0.0
    %127 = vmatpush1.msra.mxu0 0.0
    %128 = vmatprep.subr.mxu0 0.0
    %129 = vmatpush1.msra.mxu0 0.0
    %130 = vmatprep.subr.mxu0 0.0
    %131 = vmatpush1.msra.mxu0 0.0
    %132 = vmatprep.subr.mxu0 0.0
    %133 = vmatpush1.msra.mxu0 0.0
    %134 = vmatprep.subr.mxu0 0.0
    %135 = vmatpush1.msra.mxu0 0.0
    %136 = vmatprep.subr.mxu0 0.0
    %137 = vmatpush1.msra.mxu0 0.0
    %138 = vmatprep.subr.mxu0 0.0
    %139 = vmatpush1.msra.mxu0 %v98
    %140 = vmatprep.subr.mxu0 0.0
    %141 = vmatpush1.msra.mxu0 %v97
    %142 = vmatprep.subr.mxu0 0.0
    %143 = vmatpush2.msra.mxu0 0.0
    %144 = vmatprep.subr.mxu0 0.0
    %145 = vmatpush2.msra.mxu0 0.0
    %146 = vmatprep.subr.mxu0 0.0
    %147 = vmatpush2.msra.mxu0 0.0
    %148 = vmatprep.subr.mxu0 0.0
    %149 = vmatpush2.msra.mxu0 0.0
    %150 = vmatprep.subr.mxu0 0.0
    %151 = vmatpush2.msra.mxu0 0.0
    %152 = vmatprep.subr.mxu0 0.0
    %153 = vmatpush2.msra.mxu0 0.0
    %154 = vmatprep.subr.mxu0 0.0
    %155 = vmatpush2.msra.mxu0 0.0
    %156 = vmatprep.subr.mxu0 0.0
    %157 = vmatpush2.msra.mxu0 0.0
    %158 = vmatprep.subr.mxu0 0.0
    %159 = vmatpush2.msra.mxu0 0.0
    %160 = vmatprep.subr.mxu0 0.0
    %161 = vmatpush2.msra.mxu0 0.0
    %162 = vmatprep.subr.mxu0 0.0
    %163 = vmatpush2.msra.mxu0 0.0
    %164 = vmatprep.subr.mxu0 0.0
    %165 = vmatpush2.msra.mxu0 0.0
    %166 = vmatprep.subr.mxu0 0.0
    %167 = vmatpush2.msra.mxu0 0.0
    %168 = vmatprep.subr.mxu0 0.0
    %169 = vmatpush2.msra.mxu0 0.0
    %170 = vmatprep.subr.mxu0 0.0
    %171 = vmatpush2.msra.mxu0 0.0
    %172 = vmatprep.subr.mxu0 0.0
    %173 = vmatpush2.msra.mxu0 0.0
    %174 = vmatprep.mubr.f32.mxu0 0.0
    %175 = vmatmul.mubr.f32.gmra.mxu0 %v108
    %v176 = vpop.f32.mrf.mxu0
    %v177 = vadd.f32 %v104, %v176
    %v178 = vpop.f32.mrf.mxu0
    %179 = vdwg.mxu0
    %v180 = vmax.f32 %v177, 0.0
    %v181 = vld [vmem:[#allocation7] sm:$0xff]
    %v182 = vld [vmem:[#allocation7 + $0x8] sm:$0xff]
    %v183 = vld [vmem:[#allocation7 + $0x10] sm:$0xff]
    %v184 = vld [vmem:[#allocation7 + $0x18] sm:$0xff]
    %v185 = vld [vmem:[#allocation7 + $0x20] sm:$0xff]
    %v186 = vld [vmem:[#allocation7 + $0x28] sm:$0xff]
    %v187 = vld [vmem:[#allocation7 + $0x30] sm:$0xff]
    %v188 = vld [vmem:[#allocation7 + $0x38] sm:$0xff]
    %v189 = vld [vmem:[#allocation7 + $0x40] sm:$0xff]
    %v190 = vld [vmem:[#allocation7 + $0x48] sm:$0xff]
    %v191 = vld [vmem:[#allocation7 + $0x50] sm:$0xff]
    %v192 = vld [vmem:[#allocation7 + $0x58] sm:$0xff]
    %v193 = vld [vmem:[#allocation7 + $0x60] sm:$0xff]
    %v194 = vld [vmem:[#allocation7 + $0x68] sm:$0xff]
    %v195 = vld [vmem:[#allocation7 + $0x70] sm:$0xff]
    %v196 = vld [vmem:[#allocation7 + $0x78] sm:$0xff]
    %v197 = vld [vmem:[#allocation7 + $0x80] sm:$0xff]
    %v198 = vld [vmem:[#allocation7 + $0x88] sm:$0xff]
    %v199 = vld [vmem:[#allocation7 + $0x90] sm:$0xff]
    %v200 = vld [vmem:[#allocation7 + $0x98] sm:$0xff]
    %v201 = vld [vmem:[#allocation7 + $0xa0] sm:$0xff]
    %v202 = vld [vmem:[#allocation7 + $0xa8] sm:$0xff]
    %v203 = vld [vmem:[#allocation7 + $0xb0] sm:$0xff]
    %v204 = vld [vmem:[#allocation7 + $0xb8] sm:$0xff]
    %v205 = vld [vmem:[#allocation7 + $0xc0] sm:$0xff]
    %v206 = vld [vmem:[#allocation7 + $0xc8] sm:$0xff]
    %v207 = vld [vmem:[#allocation7 + $0xd0] sm:$0xff]
    %v208 = vld [vmem:[#allocation7 + $0xd8] sm:$0xff]
    %v209 = vld [vmem:[#allocation7 + $0xe0] sm:$0xff]
    %v210 = vld [vmem:[#allocation7 + $0xe8] sm:$0xff]
    %v211 = vld [vmem:[#allocation7 + $0xf0] sm:$0xff]
    %v212 = vld [vmem:[#allocation7 + $0xf8] sm:$0xff]
    %v213 = vld [vmem:[%s4] sm:$0x3]
    %v215 = vlaneseq
    %v216 = vshrl.u32 %v215, 7
    %v217 = vsub.s32 0, %v216
    %v218 = vrot.slane %v213, %v217
    %v219 = vlaneseq
    %v220 = vshrl.u32 %v219, 7
    %v221 = vsub.s32 1, %v220
    %v222 = vrot.slane %v213, %v221
    %225 = vmatprep.subr.mxu0 %v212
    %226 = vmatpush1.msra.mxu0 %v211
    %227 = vmatprep.subr.mxu0 %v210
    %228 = vmatpush1.msra.mxu0 %v209
    %229 = vmatprep.subr.mxu0 %v208
    %230 = vmatpush1.msra.mxu0 %v207
    %231 = vmatprep.subr.mxu0 %v206
    %232 = vmatpush1.msra.mxu0 %v205
    %233 = vmatprep.subr.mxu0 %v204
    %234 = vmatpush1.msra.mxu0 %v203
    %235 = vmatprep.subr.mxu0 %v202
    %236 = vmatpush1.msra.mxu0 %v201
    %237 = vmatprep.subr.mxu0 %v200
    %238 = vmatpush1.msra.mxu0 %v199
    %239 = vmatprep.subr.mxu0 %v198
    %240 = vmatpush1.msra.mxu0 %v197
    %241 = vmatprep.subr.mxu0 %v196
    %242 = vmatpush1.msra.mxu0 %v195
    %243 = vmatprep.subr.mxu0 %v194
    %244 = vmatpush1.msra.mxu0 %v193
    %245 = vmatprep.subr.mxu0 %v192
    %246 = vmatpush1.msra.mxu0 %v191
    %247 = vmatprep.subr.mxu0 %v190
    %248 = vmatpush1.msra.mxu0 %v189
    %249 = vmatprep.subr.mxu0 %v188
    %250 = vmatpush1.msra.mxu0 %v187
    %251 = vmatprep.subr.mxu0 %v186
    %252 = vmatpush1.msra.mxu0 %v185
    %253 = vmatprep.subr.mxu0 %v184
    %254 = vmatpush1.msra.mxu0 %v183
    %255 = vmatprep.subr.mxu0 %v182
    %256 = vmatpush1.msra.mxu0 %v181
    %257 = vmatprep.subr.mxu0 0.0
    %258 = vmatpush2.msra.mxu0 0.0
    %259 = vmatprep.subr.mxu0 0.0
    %260 = vmatpush2.msra.mxu0 0.0
    %261 = vmatprep.subr.mxu0 0.0
    %262 = vmatpush2.msra.mxu0 0.0
    %263 = vmatprep.subr.mxu0 0.0
    %264 = vmatpush2.msra.mxu0 0.0
    %265 = vmatprep.subr.mxu0 0.0
    %266 = vmatpush2.msra.mxu0 0.0
    %267 = vmatprep.subr.mxu0 0.0
    %268 = vmatpush2.msra.mxu0 0.0
    %269 = vmatprep.subr.mxu0 0.0
    %270 = vmatpush2.msra.mxu0 0.0
    %271 = vmatprep.subr.mxu0 0.0
    %272 = vmatpush2.msra.mxu0 0.0
    %273 = vmatprep.subr.mxu0 0.0
    %274 = vmatpush2.msra.mxu0 0.0
    %275 = vmatprep.subr.mxu0 0.0
    %276 = vmatpush2.msra.mxu0 0.0
    %277 = vmatprep.subr.mxu0 0.0
    %278 = vmatpush2.msra.mxu0 0.0
    %279 = vmatprep.subr.mxu0 0.0
    %280 = vmatpush2.msra.mxu0 0.0
    %281 = vmatprep.subr.mxu0 0.0
    %282 = vmatpush2.msra.mxu0 0.0
    %283 = vmatprep.subr.mxu0 0.0
    %284 = vmatpush2.msra.mxu0 0.0
    %285 = vmatprep.subr.mxu0 0.0
    %286 = vmatpush2.msra.mxu0 0.0
    %287 = vmatprep.subr.mxu0 0.0
    %288 = vmatpush2.msra.mxu0 0.0
    %289 = vmatprep.mubr.f32.mxu0 0.0
    %290 = vmatmul.mubr.f32.gmra.mxu0 %v180
    %v291 = vpop.f32.mrf.mxu0
    %v292 = vadd.f32 %v218, %v291
    %v293 = vpop.f32.mrf.mxu0
    %v294 = vadd.f32 %v222, %v293
    %295 = vdwg.mxu0
    %v296 = vmax.f32 %v292, 0.0
    %v297 = vmax.f32 %v294, 0.0
    %v298 = vld [vmem:[#allocation8] sm:$0xff]
    %v299 = vld [vmem:[#allocation8 + $0x8] sm:$0xff]
    %v300 = vld [vmem:[#allocation8 + $0x10] sm:$0xff]
    %v301 = vld [vmem:[#allocation8 + $0x18] sm:$0xff]
    %v302 = vld [vmem:[#allocation8 + $0x20] sm:$0xff]
    %v303 = vld [vmem:[#allocation8 + $0x28] sm:$0xff]
    %v304 = vld [vmem:[#allocation8 + $0x30] sm:$0xff]
    %v305 = vld [vmem:[#allocation8 + $0x38] sm:$0xff]
    %v306 = vld [vmem:[#allocation8 + $0x40] sm:$0xff]
    %v307 = vld [vmem:[#allocation8 + $0x48] sm:$0xff]
    %v308 = vld [vmem:[#allocation8 + $0x50] sm:$0xff]
    %v309 = vld [vmem:[#allocation8 + $0x58] sm:$0xff]
    %v310 = vld [vmem:[#allocation8 + $0x60] sm:$0xff]
    %v311 = vld [vmem:[#allocation8 + $0x68] sm:$0xff]
    %v312 = vld [vmem:[#allocation8 + $0x70] sm:$0xff]
    %v313 = vld [vmem:[#allocation8 + $0x78] sm:$0xff]
    %v314 = vld [vmem:[#allocation8 + $0x80] sm:$0xff]
    %v315 = vld [vmem:[#allocation8 + $0x88] sm:$0xff]
    %v316 = vld [vmem:[#allocation8 + $0x90] sm:$0xff]
    %v317 = vld [vmem:[#allocation8 + $0x98] sm:$0xff]
    %v318 = vld [vmem:[#allocation8 + $0xa0] sm:$0xff]
    %v319 = vld [vmem:[#allocation8 + $0xa8] sm:$0xff]
    %v320 = vld [vmem:[#allocation8 + $0xb0] sm:$0xff]
    %v321 = vld [vmem:[#allocation8 + $0xb8] sm:$0xff]
    %v322 = vld [vmem:[#allocation8 + $0xc0] sm:$0xff]
    %v323 = vld [vmem:[#allocation8 + $0xc8] sm:$0xff]
    %v324 = vld [vmem:[#allocation8 + $0xd0] sm:$0xff]
    %v325 = vld [vmem:[#allocation8 + $0xd8] sm:$0xff]
    %v326 = vld [vmem:[#allocation8 + $0xe0] sm:$0xff]
    %v327 = vld [vmem:[#allocation8 + $0xe8] sm:$0xff]
    %v328 = vld [vmem:[#allocation8 + $0xf0] sm:$0xff]
    %v329 = vld [vmem:[#allocation8 + $0xf8] sm:$0xff]
    %v330 = vld [vmem:[#allocation8 + $0x100] sm:$0xff]
    %v331 = vld [vmem:[#allocation8 + $0x108] sm:$0xff]
    %v332 = vld [vmem:[#allocation8 + $0x110] sm:$0xff]
    %v333 = vld [vmem:[#allocation8 + $0x118] sm:$0xff]
    %v334 = vld [vmem:[#allocation8 + $0x120] sm:$0xff]
    %v335 = vld [vmem:[#allocation8 + $0x128] sm:$0xff]
    %v336 = vld [vmem:[#allocation8 + $0x130] sm:$0xff]
    %v337 = vld [vmem:[#allocation8 + $0x138] sm:$0xff]
    %v338 = vld [vmem:[#allocation8 + $0x140] sm:$0xff]
    %v339 = vld [vmem:[#allocation8 + $0x148] sm:$0xff]
    %v340 = vld [vmem:[#allocation8 + $0x150] sm:$0xff]
    %v341 = vld [vmem:[#allocation8 + $0x158] sm:$0xff]
    %v342 = vld [vmem:[#allocation8 + $0x160] sm:$0xff]
    %v343 = vld [vmem:[#allocation8 + $0x168] sm:$0xff]
    %v344 = vld [vmem:[#allocation8 + $0x170] sm:$0xff]
    %v345 = vld [vmem:[#allocation8 + $0x178] sm:$0xff]
    %v346 = vld [vmem:[#allocation8 + $0x180] sm:$0xff]
    %v347 = vld [vmem:[#allocation8 + $0x188] sm:$0xff]
    %v348 = vld [vmem:[#allocation8 + $0x190] sm:$0xff]
    %v349 = vld [vmem:[#allocation8 + $0x198] sm:$0xff]
    %v350 = vld [vmem:[#allocation8 + $0x1a0] sm:$0xff]
    %v351 = vld [vmem:[#allocation8 + $0x1a8] sm:$0xff]
    %v352 = vld [vmem:[#allocation8 + $0x1b0] sm:$0xff]
    %v353 = vld [vmem:[#allocation8 + $0x1b8] sm:$0xff]
    %v354 = vld [vmem:[#allocation8 + $0x1c0] sm:$0xff]
    %v355 = vld [vmem:[#allocation8 + $0x1c8] sm:$0xff]
    %v356 = vld [vmem:[#allocation8 + $0x1d0] sm:$0xff]
    %v357 = vld [vmem:[#allocation8 + $0x1d8] sm:$0xff]
    %v358 = vld [vmem:[#allocation8 + $0x1e0] sm:$0xff]
    %v359 = vld [vmem:[#allocation8 + $0x1e8] sm:$0xff]
    %v360 = vld [vmem:[#allocation8 + $0x1f0] sm:$0xff]
    %v361 = vld [vmem:[#allocation8 + $0x1f8] sm:$0xff]
    %v362 = vld [vmem:[#allocation8 + $0x200] sm:$0xff]
    %v363 = vld [vmem:[#allocation8 + $0x208] sm:$0xff]
    %v364 = vld [vmem:[#allocation8 + $0x210] sm:$0xff]
    %v365 = vld [vmem:[#allocation8 + $0x218] sm:$0xff]
    %v366 = vld [vmem:[#allocation8 + $0x220] sm:$0xff]
    %v367 = vld [vmem:[#allocation8 + $0x228] sm:$0xff]
    %v368 = vld [vmem:[#allocation8 + $0x230] sm:$0xff]
    %v369 = vld [vmem:[#allocation8 + $0x238] sm:$0xff]
    %v370 = vld [vmem:[#allocation8 + $0x240] sm:$0xff]
    %v371 = vld [vmem:[#allocation8 + $0x248] sm:$0xff]
    %v372 = vld [vmem:[#allocation8 + $0x250] sm:$0xff]
    %v373 = vld [vmem:[#allocation8 + $0x258] sm:$0xff]
    %v374 = vld [vmem:[#allocation8 + $0x260] sm:$0xff]
    %v375 = vld [vmem:[#allocation8 + $0x268] sm:$0xff]
    %v376 = vld [vmem:[#allocation8 + $0x270] sm:$0xff]
    %v377 = vld [vmem:[#allocation8 + $0x278] sm:$0xff]
    %v378 = vld [vmem:[#allocation8 + $0x280] sm:$0xff]
    %v379 = vld [vmem:[#allocation8 + $0x288] sm:$0xff]
    %v380 = vld [vmem:[#allocation8 + $0x290] sm:$0xff]
    %v381 = vld [vmem:[#allocation8 + $0x298] sm:$0xff]
    %v382 = vld [vmem:[#allocation8 + $0x2a0] sm:$0xff]
    %v383 = vld [vmem:[#allocation8 + $0x2a8] sm:$0xff]
    %v384 = vld [vmem:[#allocation8 + $0x2b0] sm:$0xff]
    %v385 = vld [vmem:[#allocation8 + $0x2b8] sm:$0xff]
    %v386 = vld [vmem:[#allocation8 + $0x2c0] sm:$0xff]
    %v387 = vld [vmem:[#allocation8 + $0x2c8] sm:$0xff]
    %v388 = vld [vmem:[#allocation8 + $0x2d0] sm:$0xff]
    %v389 = vld [vmem:[#allocation8 + $0x2d8] sm:$0xff]
    %v390 = vld [vmem:[#allocation8 + $0x2e0] sm:$0xff]
    %v391 = vld [vmem:[#allocation8 + $0x2e8] sm:$0xff]
    %v392 = vld [vmem:[#allocation8 + $0x2f0] sm:$0xff]
    %v393 = vld [vmem:[#allocation8 + $0x2f8] sm:$0xff]
    %v394 = vld [vmem:[#allocation8 + $0x300] sm:$0xff]
    %v395 = vld [vmem:[#allocation8 + $0x308] sm:$0xff]
    %v396 = vld [vmem:[#allocation8 + $0x310] sm:$0xff]
    %v397 = vld [vmem:[#allocation8 + $0x318] sm:$0xff]
    %v398 = vld [vmem:[#allocation8 + $0x320] sm:$0xff]
    %v399 = vld [vmem:[#allocation8 + $0x328] sm:$0xff]
    %v400 = vld [vmem:[#allocation8 + $0x330] sm:$0xff]
    %v401 = vld [vmem:[#allocation8 + $0x338] sm:$0xff]
    %v402 = vld [vmem:[#allocation8 + $0x340] sm:$0xff]
    %v403 = vld [vmem:[#allocation8 + $0x348] sm:$0xff]
    %v404 = vld [vmem:[#allocation8 + $0x350] sm:$0xff]
    %v405 = vld [vmem:[#allocation8 + $0x358] sm:$0xff]
    %v406 = vld [vmem:[#allocation8 + $0x360] sm:$0xff]
    %v407 = vld [vmem:[#allocation8 + $0x368] sm:$0xff]
    %v408 = vld [vmem:[#allocation8 + $0x370] sm:$0xff]
    %v409 = vld [vmem:[#allocation8 + $0x378] sm:$0xff]
    %v410 = vld [vmem:[#allocation8 + $0x380] sm:$0xff]
    %v411 = vld [vmem:[#allocation8 + $0x388] sm:$0xff]
    %v412 = vld [vmem:[#allocation8 + $0x390] sm:$0xff]
    %v413 = vld [vmem:[#allocation8 + $0x398] sm:$0xff]
    %v414 = vld [vmem:[#allocation8 + $0x3a0] sm:$0xff]
    %v415 = vld [vmem:[#allocation8 + $0x3a8] sm:$0xff]
    %v416 = vld [vmem:[#allocation8 + $0x3b0] sm:$0xff]
    %v417 = vld [vmem:[#allocation8 + $0x3b8] sm:$0xff]
    %v418 = vld [vmem:[#allocation8 + $0x3c0] sm:$0xff]
    %v419 = vld [vmem:[#allocation8 + $0x3c8] sm:$0xff]
    %v420 = vld [vmem:[#allocation8 + $0x3d0] sm:$0xff]
    %v421 = vld [vmem:[#allocation8 + $0x3d8] sm:$0xff]
    %v422 = vld [vmem:[#allocation8 + $0x3e0] sm:$0xff]
    %v423 = vld [vmem:[#allocation8 + $0x3e8] sm:$0xff]
    %v424 = vld [vmem:[#allocation8 + $0x3f0] sm:$0xff]
    %v425 = vld [vmem:[#allocation8 + $0x3f8] sm:$0xff]
    %v426 = vld [vmem:[%s6] sm:$0xf]
    %v428 = vlaneseq
    %v429 = vshrl.u32 %v428, 7
    %v430 = vsub.s32 0, %v429
    %v431 = vrot.slane %v426, %v430
    %v432 = vlaneseq
    %v433 = vshrl.u32 %v432, 7
    %v434 = vsub.s32 1, %v433
    %v435 = vrot.slane %v426, %v434
    %v436 = vlaneseq
    %v437 = vshrl.u32 %v436, 7
    %v438 = vsub.s32 2, %v437
    %v439 = vrot.slane %v426, %v438
    %v440 = vlaneseq
    %v441 = vshrl.u32 %v440, 7
    %v442 = vsub.s32 3, %v441
    %v443 = vrot.slane %v426, %v442
    %448 = vmatprep.subr.mxu0 %v359
    %449 = vmatpush1.msra.mxu0 %v358
    %450 = vmatprep.subr.mxu0 %v355
    %451 = vmatpush1.msra.mxu0 %v354
    %452 = vmatprep.subr.mxu0 %v351
    %453 = vmatpush1.msra.mxu0 %v350
    %454 = vmatprep.subr.mxu0 %v347
    %455 = vmatpush1.msra.mxu0 %v346
    %456 = vmatprep.subr.mxu0 %v343
    %457 = vmatpush1.msra.mxu0 %v342
    %458 = vmatprep.subr.mxu0 %v339
    %459 = vmatpush1.msra.mxu0 %v338
    %460 = vmatprep.subr.mxu0 %v335
    %461 = vmatpush1.msra.mxu0 %v334
    %462 = vmatprep.subr.mxu0 %v331
    %463 = vmatpush1.msra.mxu0 %v330
    %464 = vmatprep.subr.mxu0 %v327
    %465 = vmatpush1.msra.mxu0 %v326
    %466 = vmatprep.subr.mxu0 %v323
    %467 = vmatpush1.msra.mxu0 %v322
    %468 = vmatprep.subr.mxu0 %v319
    %469 = vmatpush1.msra.mxu0 %v318
    %470 = vmatprep.subr.mxu0 %v315
    %471 = vmatpush1.msra.mxu0 %v314
    %472 = vmatprep.subr.mxu0 %v311
    %473 = vmatpush1.msra.mxu0 %v310
    %474 = vmatprep.subr.mxu0 %v307
    %475 = vmatpush1.msra.mxu0 %v306
    %476 = vmatprep.subr.mxu0 %v303
    %477 = vmatpush1.msra.mxu0 %v302
    %478 = vmatprep.subr.mxu0 %v299
    %479 = vmatpush1.msra.mxu0 %v298
    %480 = vmatprep.subr.mxu0 %v423
    %481 = vmatpush2.msra.mxu0 %v422
    %482 = vmatprep.subr.mxu0 %v419
    %483 = vmatpush2.msra.mxu0 %v418
    %484 = vmatprep.subr.mxu0 %v415
    %485 = vmatpush2.msra.mxu0 %v414
    %486 = vmatprep.subr.mxu0 %v411
    %487 = vmatpush2.msra.mxu0 %v410
    %488 = vmatprep.subr.mxu0 %v407
    %489 = vmatpush2.msra.mxu0 %v406
    %490 = vmatprep.subr.mxu0 %v403
    %491 = vmatpush2.msra.mxu0 %v402
    %492 = vmatprep.subr.mxu0 %v399
    %493 = vmatpush2.msra.mxu0 %v398
    %494 = vmatprep.subr.mxu0 %v395
    %495 = vmatpush2.msra.mxu0 %v394
    %496 = vmatprep.subr.mxu0 %v391
    %497 = vmatpush2.msra.mxu0 %v390
    %498 = vmatprep.subr.mxu0 %v387
    %499 = vmatpush2.msra.mxu0 %v386
    %500 = vmatprep.subr.mxu0 %v383
    %501 = vmatpush2.msra.mxu0 %v382
    %502 = vmatprep.subr.mxu0 %v379
    %503 = vmatpush2.msra.mxu0 %v378
    %504 = vmatprep.subr.mxu0 %v375
    %505 = vmatpush2.msra.mxu0 %v374
    %506 = vmatprep.subr.mxu0 %v371
    %507 = vmatpush2.msra.mxu0 %v370
    %508 = vmatprep.subr.mxu0 %v367
    %509 = vmatpush2.msra.mxu0 %v366
    %510 = vmatprep.subr.mxu0 %v363
    %511 = vmatpush2.msra.mxu0 %v362
    %512 = vmatprep.mubr.f32.mxu0 %v297
    %513 = vmatmul.mubr.f32.gmra.mxu0 %v296
    %v514 = vpop.f32.mrf.mxu0
    %v515 = vadd.f32 %v431, %v514
    %v516 = vpop.f32.mrf.mxu0
    %v517 = vadd.f32 %v435, %v516
    %518 = vdwg.mxu0
    %519 = vmatprep.subr.mxu0 %v361
    %520 = vmatpush1.msra.mxu0 %v360
    %521 = vmatprep.subr.mxu0 %v357
    %522 = vmatpush1.msra.mxu0 %v356
    %523 = vmatprep.subr.mxu0 %v353
    %524 = vmatpush1.msra.mxu0 %v352
    %525 = vmatprep.subr.mxu0 %v349
    %526 = vmatpush1.msra.mxu0 %v348
    %527 = vmatprep.subr.mxu0 %v345
    %528 = vmatpush1.msra.mxu0 %v344
    %529 = vmatprep.subr.mxu0 %v341
    %530 = vmatpush1.msra.mxu0 %v340
    %531 = vmatprep.subr.mxu0 %v337
    %532 = vmatpush1.msra.mxu0 %v336
    %533 = vmatprep.subr.mxu0 %v333
    %534 = vmatpush1.msra.mxu0 %v332
    %535 = vmatprep.subr.mxu0 %v329
    %536 = vmatpush1.msra.mxu0 %v328
    %537 = vmatprep.subr.mxu0 %v325
    %538 = vmatpush1.msra.mxu0 %v324
    %539 = vmatprep.subr.mxu0 %v321
    %540 = vmatpush1.msra.mxu0 %v320
    %541 = vmatprep.subr.mxu0 %v317
    %542 = vmatpush1.msra.mxu0 %v316
    %543 = vmatprep.subr.mxu0 %v313
    %544 = vmatpush1.msra.mxu0 %v312
    %545 = vmatprep.subr.mxu0 %v309
    %546 = vmatpush1.msra.mxu0 %v308
    %547 = vmatprep.subr.mxu0 %v305
    %548 = vmatpush1.msra.mxu0 %v304
    %549 = vmatprep.subr.mxu0 %v301
    %550 = vmatpush1.msra.mxu0 %v300
    %551 = vmatprep.subr.mxu0 %v425
    %552 = vmatpush2.msra.mxu0 %v424
    %553 = vmatprep.subr.mxu0 %v421
    %554 = vmatpush2.msra.mxu0 %v420
    %555 = vmatprep.subr.mxu0 %v417
    %556 = vmatpush2.msra.mxu0 %v416
    %557 = vmatprep.subr.mxu0 %v413
    %558 = vmatpush2.msra.mxu0 %v412
    %559 = vmatprep.subr.mxu0 %v409
    %560 = vmatpush2.msra.mxu0 %v408
    %561 = vmatprep.subr.mxu0 %v405
    %562 = vmatpush2.msra.mxu0 %v404
    %563 = vmatprep.subr.mxu0 %v401
    %564 = vmatpush2.msra.mxu0 %v400
    %565 = vmatprep.subr.mxu0 %v397
    %566 = vmatpush2.msra.mxu0 %v396
    %567 = vmatprep.subr.mxu0 %v393
    %568 = vmatpush2.msra.mxu0 %v392
    %569 = vmatprep.subr.mxu0 %v389
    %570 = vmatpush2.msra.mxu0 %v388
    %571 = vmatprep.subr.mxu0 %v385
    %572 = vmatpush2.msra.mxu0 %v384
    %573 = vmatprep.subr.mxu0 %v381
    %574 = vmatpush2.msra.mxu0 %v380
    %575 = vmatprep.subr.mxu0 %v377
    %576 = vmatpush2.msra.mxu0 %v376
    %577 = vmatprep.subr.mxu0 %v373
    %578 = vmatpush2.msra.mxu0 %v372
    %579 = vmatprep.subr.mxu0 %v369
    %580 = vmatpush2.msra.mxu0 %v368
    %581 = vmatprep.subr.mxu0 %v365
    %582 = vmatpush2.msra.mxu0 %v364
    %583 = vmatprep.mubr.f32.mxu0 %v297
    %584 = vmatmul.mubr.f32.gmra.mxu0 %v296
    %v585 = vpop.f32.mrf.mxu0
    %v586 = vadd.f32 %v439, %v585
    %v587 = vpop.f32.mrf.mxu0
    %v588 = vadd.f32 %v443, %v587
    %589 = vdwg.mxu0
    %590 = vmax.xlane.f32.xlu0 %v515
    %v591 = vpop.xlane.xlu0 %590
    %v592 = vsub.f32 %v515, %v591
    %v593 = vmul.f32 %v592, 1.442695
    %v594 = vpow.pop %v593
    %595 = vadd.xlane.f32.xlu0 %v594
    %v596 = vpop.xlane.xlu0 %595
    %v597 = vrcp.pop %v596
    %v598 = vmul.f32 %v594, %v597
    %v599 = vmax.f32 %v598, 0.001
    %600 = vmax.xlane.f32.xlu0 %v517
    %v601 = vpop.xlane.xlu0 %600
    %v602 = vsub.f32 %v517, %v601
    %v603 = vmul.f32 %v602, 1.442695
    %v604 = vpow.pop %v603
    %605 = vadd.xlane.f32.xlu0 %v604
    %v606 = vpop.xlane.xlu0 %605
    %v607 = vrcp.pop %v606
    %v608 = vmul.f32 %v604, %v607
    %v609 = vmax.f32 %v608, 0.001
    %610 = vmax.xlane.f32.xlu0 %v586
    %v611 = vpop.xlane.xlu0 %610
    %v612 = vsub.f32 %v586, %v611
    %v613 = vmul.f32 %v612, 1.442695
    %v614 = vpow.pop %v613
    %615 = vadd.xlane.f32.xlu0 %v614
    %v616 = vpop.xlane.xlu0 %615
    %v617 = vrcp.pop %v616
    %v618 = vmul.f32 %v614, %v617
    %v619 = vmax.f32 %v618, 0.001
    %620 = vmax.xlane.f32.xlu0 %v588
    %v621 = vpop.xlane.xlu0 %620
    %v622 = vsub.f32 %v588, %v621
    %v623 = vmul.f32 %v622, 1.442695
    %v624 = vpow.pop %v623
    %625 = vadd.xlane.f32.xlu0 %v624
    %v626 = vpop.xlane.xlu0 %625
    %v627 = vrcp.pop %v626
    %v628 = vmul.f32 %v624, %v627
    %v629 = vmax.f32 %v628, 0.001
    %v630 = vld [vmem:[#allocation10] sm:$0xff]
    %v631 = vld [vmem:[#allocation10 + $0x8] sm:$0xff]
    %v632 = vld [vmem:[#allocation10 + $0x10] sm:$0xff]
    %v633 = vld [vmem:[#allocation10 + $0x18] sm:$0xff]
    %v634 = vld [vmem:[#allocation10 + $0x20] sm:$0xff]
    %v635 = vld [vmem:[#allocation10 + $0x28] sm:$0xff]
    %v636 = vld [vmem:[#allocation10 + $0x30] sm:$0xff]
    %v637 = vld [vmem:[#allocation10 + $0x38] sm:$0xff]
    %v638 = vld [vmem:[#allocation10 + $0x40] sm:$0xff]
    %v639 = vld [vmem:[#allocation10 + $0x48] sm:$0xff]
    %v640 = vld [vmem:[#allocation10 + $0x50] sm:$0xff]
    %v641 = vld [vmem:[#allocation10 + $0x58] sm:$0xff]
    %v642 = vld [vmem:[#allocation10 + $0x60] sm:$0xff]
    %v643 = vld [vmem:[#allocation10 + $0x68] sm:$0xff]
    %v644 = vld [vmem:[#allocation10 + $0x70] sm:$0xff]
    %v645 = vld [vmem:[#allocation10 + $0x78] sm:$0xff]
    %v646 = vld [vmem:[#allocation10 + $0x80] sm:$0xff]
    %v647 = vld [vmem:[#allocation10 + $0x88] sm:$0xff]
    %v648 = vld [vmem:[#allocation10 + $0x90] sm:$0xff]
    %v649 = vld [vmem:[#allocation10 + $0x98] sm:$0xff]
    %v650 = vld [vmem:[#allocation10 + $0xa0] sm:$0xff]
    %v651 = vld [vmem:[#allocation10 + $0xa8] sm:$0xff]
    %v652 = vld [vmem:[#allocation10 + $0xb0] sm:$0xff]
    %v653 = vld [vmem:[#allocation10 + $0xb8] sm:$0xff]
    %v654 = vld [vmem:[#allocation10 + $0xc0] sm:$0xff]
    %v655 = vld [vmem:[#allocation10 + $0xc8] sm:$0xff]
    %v656 = vld [vmem:[#allocation10 + $0xd0] sm:$0xff]
    %v657 = vld [vmem:[#allocation10 + $0xd8] sm:$0xff]
    %v658 = vld [vmem:[#allocation10 + $0xe0] sm:$0xff]
    %v659 = vld [vmem:[#allocation10 + $0xe8] sm:$0xff]
    %v660 = vld [vmem:[#allocation10 + $0xf0] sm:$0xff]
    %v661 = vld [vmem:[#allocation10 + $0xf8] sm:$0xff]
    %v662 = vld [vmem:[#allocation10 + $0x100] sm:$0xff]
    %v663 = vld [vmem:[#allocation10 + $0x108] sm:$0xff]
    %v664 = vld [vmem:[#allocation10 + $0x110] sm:$0xff]
    %v665 = vld [vmem:[#allocation10 + $0x118] sm:$0xff]
    %v666 = vld [vmem:[#allocation10 + $0x120] sm:$0xff]
    %v667 = vld [vmem:[#allocation10 + $0x128] sm:$0xff]
    %v668 = vld [vmem:[#allocation10 + $0x130] sm:$0xff]
    %v669 = vld [vmem:[#allocation10 + $0x138] sm:$0xff]
    %v670 = vld [vmem:[#allocation10 + $0x140] sm:$0xff]
    %v671 = vld [vmem:[#allocation10 + $0x148] sm:$0xff]
    %v672 = vld [vmem:[#allocation10 + $0x150] sm:$0xff]
    %v673 = vld [vmem:[#allocation10 + $0x158] sm:$0xff]
    %v674 = vld [vmem:[#allocation10 + $0x160] sm:$0xff]
    %v675 = vld [vmem:[#allocation10 + $0x168] sm:$0xff]
    %v676 = vld [vmem:[#allocation10 + $0x170] sm:$0xff]
    %v677 = vld [vmem:[#allocation10 + $0x178] sm:$0xff]
    %v678 = vld [vmem:[#allocation10 + $0x180] sm:$0xff]
    %v679 = vld [vmem:[#allocation10 + $0x188] sm:$0xff]
    %v680 = vld [vmem:[#allocation10 + $0x190] sm:$0xff]
    %v681 = vld [vmem:[#allocation10 + $0x198] sm:$0xff]
    %v682 = vld [vmem:[#allocation10 + $0x1a0] sm:$0xff]
    %v683 = vld [vmem:[#allocation10 + $0x1a8] sm:$0xff]
    %v684 = vld [vmem:[#allocation10 + $0x1b0] sm:$0xff]
    %v685 = vld [vmem:[#allocation10 + $0x1b8] sm:$0xff]
    %v686 = vld [vmem:[#allocation10 + $0x1c0] sm:$0xff]
    %v687 = vld [vmem:[#allocation10 + $0x1c8] sm:$0xff]
    %v688 = vld [vmem:[#allocation10 + $0x1d0] sm:$0xff]
    %v689 = vld [vmem:[#allocation10 + $0x1d8] sm:$0xff]
    %v690 = vld [vmem:[#allocation10 + $0x1e0] sm:$0xff]
    %v691 = vld [vmem:[#allocation10 + $0x1e8] sm:$0xff]
    %v692 = vld [vmem:[#allocation10 + $0x1f0] sm:$0xff]
    %v693 = vld [vmem:[#allocation10 + $0x1f8] sm:$0xff]
    %694 = vmatprep.subr.mxu0 0.0
    %695 = vmatpush1.msra.mxu0 %v645
    %696 = vmatprep.subr.mxu0 0.0
    %697 = vmatpush1.msra.mxu0 %v644
    %698 = vmatprep.subr.mxu0 0.0
    %699 = vmatpush1.msra.mxu0 %v643
    %700 = vmatprep.subr.mxu0 0.0
    %701 = vmatpush1.msra.mxu0 %v642
    %702 = vmatprep.subr.mxu0 0.0
    %703 = vmatpush1.msra.mxu0 %v641
    %704 = vmatprep.subr.mxu0 0.0
    %705 = vmatpush1.msra.mxu0 %v640
    %706 = vmatprep.subr.mxu0 0.0
    %707 = vmatpush1.msra.mxu0 %v639
    %708 = vmatprep.subr.mxu0 0.0
    %709 = vmatpush1.msra.mxu0 %v638
    %710 = vmatprep.subr.mxu0 0.0
    %711 = vmatpush1.msra.mxu0 %v637
    %712 = vmatprep.subr.mxu0 0.0
    %713 = vmatpush1.msra.mxu0 %v636
    %714 = vmatprep.subr.mxu0 0.0
    %715 = vmatpush1.msra.mxu0 %v635
    %716 = vmatprep.subr.mxu0 0.0
    %717 = vmatpush1.msra.mxu0 %v634
    %718 = vmatprep.subr.mxu0 0.0
    %719 = vmatpush1.msra.mxu0 %v633
    %720 = vmatprep.subr.mxu0 0.0
    %721 = vmatpush1.msra.mxu0 %v632
    %722 = vmatprep.subr.mxu0 0.0
    %723 = vmatpush1.msra.mxu0 %v631
    %724 = vmatprep.subr.mxu0 0.0
    %725 = vmatpush1.msra.mxu0 %v630
    %726 = vmatprep.subr.mxu0 0.0
    %727 = vmatpush2.msra.mxu0 %v661
    %728 = vmatprep.subr.mxu0 0.0
    %729 = vmatpush2.msra.mxu0 %v660
    %730 = vmatprep.subr.mxu0 0.0
    %731 = vmatpush2.msra.mxu0 %v659
    %732 = vmatprep.subr.mxu0 0.0
    %733 = vmatpush2.msra.mxu0 %v658
    %734 = vmatprep.subr.mxu0 0.0
    %735 = vmatpush2.msra.mxu0 %v657
    %736 = vmatprep.subr.mxu0 0.0
    %737 = vmatpush2.msra.mxu0 %v656
    %738 = vmatprep.subr.mxu0 0.0
    %739 = vmatpush2.msra.mxu0 %v655
    %740 = vmatprep.subr.mxu0 0.0
    %741 = vmatpush2.msra.mxu0 %v654
    %742 = vmatprep.subr.mxu0 0.0
    %743 = vmatpush2.msra.mxu0 %v653
    %744 = vmatprep.subr.mxu0 0.0
    %745 = vmatpush2.msra.mxu0 %v652
    %746 = vmatprep.subr.mxu0 0.0
    %747 = vmatpush2.msra.mxu0 %v651
    %748 = vmatprep.subr.mxu0 0.0
    %749 = vmatpush2.msra.mxu0 %v650
    %750 = vmatprep.subr.mxu0 0.0
    %751 = vmatpush2.msra.mxu0 %v649
    %752 = vmatprep.subr.mxu0 0.0
    %753 = vmatpush2.msra.mxu0 %v648
    %754 = vmatprep.subr.mxu0 0.0
    %755 = vmatpush2.msra.mxu0 %v647
    %756 = vmatprep.subr.mxu0 0.0
    %757 = vmatpush2.msra.mxu0 %v646
    %758 = vmatprep.mubr.f32.mxu0 %v609
    %759 = vmatmul.mubr.f32.gmra.mxu0 %v599
    %v760 = vpop.f32.mrf.mxu0
    %v761 = vadd.f32 0.0, %v760
    %v762 = vpop.f32.mrf.mxu0
    %763 = vdwg.mxu0
    %764 = vmatprep.subr.mxu0 0.0
    %765 = vmatpush1.msra.mxu0 %v677
    %766 = vmatprep.subr.mxu0 0.0
    %767 = vmatpush1.msra.mxu0 %v676
    %768 = vmatprep.subr.mxu0 0.0
    %769 = vmatpush1.msra.mxu0 %v675
    %770 = vmatprep.subr.mxu0 0.0
    %771 = vmatpush1.msra.mxu0 %v674
    %772 = vmatprep.subr.mxu0 0.0
    %773 = vmatpush1.msra.mxu0 %v673
    %774 = vmatprep.subr.mxu0 0.0
    %775 = vmatpush1.msra.mxu0 %v672
    %776 = vmatprep.subr.mxu0 0.0
    %777 = vmatpush1.msra.mxu0 %v671
    %778 = vmatprep.subr.mxu0 0.0
    %779 = vmatpush1.msra.mxu0 %v670
    %780 = vmatprep.subr.mxu0 0.0
    %781 = vmatpush1.msra.mxu0 %v669
    %782 = vmatprep.subr.mxu0 0.0
    %783 = vmatpush1.msra.mxu0 %v668
    %784 = vmatprep.subr.mxu0 0.0
    %785 = vmatpush1.msra.mxu0 %v667
    %786 = vmatprep.subr.mxu0 0.0
    %787 = vmatpush1.msra.mxu0 %v666
    %788 = vmatprep.subr.mxu0 0.0
    %789 = vmatpush1.msra.mxu0 %v665
    %790 = vmatprep.subr.mxu0 0.0
    %791 = vmatpush1.msra.mxu0 %v664
    %792 = vmatprep.subr.mxu0 0.0
    %793 = vmatpush1.msra.mxu0 %v663
    %794 = vmatprep.subr.mxu0 0.0
    %795 = vmatpush1.msra.mxu0 %v662
    %796 = vmatprep.subr.mxu0 0.0
    %797 = vmatpush2.msra.mxu0 %v693
    %798 = vmatprep.subr.mxu0 0.0
    %799 = vmatpush2.msra.mxu0 %v692
    %800 = vmatprep.subr.mxu0 0.0
    %801 = vmatpush2.msra.mxu0 %v691
    %802 = vmatprep.subr.mxu0 0.0
    %803 = vmatpush2.msra.mxu0 %v690
    %804 = vmatprep.subr.mxu0 0.0
    %805 = vmatpush2.msra.mxu0 %v689
    %806 = vmatprep.subr.mxu0 0.0
    %807 = vmatpush2.msra.mxu0 %v688
    %808 = vmatprep.subr.mxu0 0.0
    %809 = vmatpush2.msra.mxu0 %v687
    %810 = vmatprep.subr.mxu0 0.0
    %811 = vmatpush2.msra.mxu0 %v686
    %812 = vmatprep.subr.mxu0 0.0
    %813 = vmatpush2.msra.mxu0 %v685
    %814 = vmatprep.subr.mxu0 0.0
    %815 = vmatpush2.msra.mxu0 %v684
    %816 = vmatprep.subr.mxu0 0.0
    %817 = vmatpush2.msra.mxu0 %v683
    %818 = vmatprep.subr.mxu0 0.0
    %819 = vmatpush2.msra.mxu0 %v682
    %820 = vmatprep.subr.mxu0 0.0
    %821 = vmatpush2.msra.mxu0 %v681
    %822 = vmatprep.subr.mxu0 0.0
    %823 = vmatpush2.msra.mxu0 %v680
    %824 = vmatprep.subr.mxu0 0.0
    %825 = vmatpush2.msra.mxu0 %v679
    %826 = vmatprep.subr.mxu0 0.0
    %827 = vmatpush2.msra.mxu0 %v678
    %828 = vmatprep.mubr.f32.mxu0 %v629
    %829 = vmatmul.mubr.f32.gmra.mxu0 %v619
    %v830 = vpop.f32.mrf.mxu0
    %v831 = vadd.f32 %v761, %v830
    %v832 = vpop.f32.mrf.mxu0
    %833 = vdwg.mxu0
    %834 = vst [vmem:[#allocation11] sm:$0xff] %v831
    // Predicated region
    $region54: #{tpu_custom_call.1} parent=1 // pred_check
      _
    $region55: #{tpu_custom_call.1} parent=1 // pred_check_branch
      %836 = sbr.rel (0) target = $region57
    $region56: #{tpu_custom_call.1} parent=1 // pred_region
      %s838 = ssub.s32 128, 128
      %839 = vsyncadd [#allocation4], %s838
      %s841 = sshll.u32 [#allocation11], 4
      %s842 = int_to_ptr.vmem [resolvable:$true] %s841
      %844 = dma.vmem_to_hbm [thread:$0]  %s842, 128, %s8, [#allocation4]
    $region57: #{tpu_custom_call.1} parent=1 // pred_fallthru
      _
    // Predicated region
    $region58: #{tpu_custom_call.1} parent=1 // pred_check
      _
    $region59: #{tpu_custom_call.1} parent=1 // pred_check_branch
      %846 = sbr.rel (0) target = $region61
    $region60: #{tpu_custom_call.1} parent=1 // pred_region
      %847 = dma.done [#allocation4], 128
    $region61: #{tpu_custom_call.1} parent=1 // pred_fallthru
      _
    %848 = vsyncpa [#allocation3], 1
    %849 = vsyncpa [#allocation6], 1
    %850 = vsyncpa [#allocation9], 1
    %851 = vsyncpa [#allocation4], 1

</llo_original>
